<compile_context>
chip_gen: v7x
topology: tpu7x:2x2x1
jax: 0.10.0
libtpu: 0.0.40
codegen_flags: <defaults>
</compile_context>

<pallas_src>
import math

import jax
import jax.numpy as jnp
from jax.experimental import pallas as pl
from jax.experimental.pallas import tpu as pltpu


def _round_up(x, m):
    return ((x + m - 1) // m) * m


def _cdiv(a, b):
    return (a + b - 1) // b


def _pick_tm(B):
    """Batch tile: one tile for small B; 512-2048-row tiles (>=2 steps) for large B."""
    if B <= 512:
        return _round_up(max(B, 16), 16)          # 16-row alignment (bf16 sublane packing)
    n_steps = max(2, _cdiv(B, 1536))              # >=2 steps keeps both v7x TCs busy
    return min(2048, _round_up(_cdiv(B, n_steps), 16))


def _should_split_layer2():
    """v6e/v7x: fused 256-wide layer-2 matches the 256x256 MXU.  Older gens
    (128x128 MXU) pay full price for the zero off-diagonal blocks -> split."""
    try:
        kind = jax.devices()[0].device_kind.lower()
    except Exception:
        return False
    return not ("v6" in kind or "v7" in kind)


def _make_kernel(n_actions, out_w, fc1, fc2, split_l2):
    """Kernel closure over static layer sizes / dispatch mode."""

    def kernel(x_ref, w1_ref, b1_ref, *rest):
        if split_l2:
            w2p_ref, w2v_ref, b2_ref, wh_ref, bh_ref, out_ref = rest
        else:
            w2_ref, b2_ref, wh_ref, bh_ref, out_ref = rest

        # Inputs already bf16 (cast in wrapper); accumulate + elementwise in f32.
        x = x_ref[...]

        # Fused trunk layer 1: [TM, 2*fc1] = [policy half | value half].
        h = (jnp.dot(x, w1_ref[...], preferred_element_type=jnp.float32)
             + b1_ref[...])
        h = jnp.maximum(h, 0.0)

        if split_l2:
            # Two 128-wide dots (v5e et al.: no zero-block vmatmul pushes).
            hp = h[:, :fc1].astype(jnp.bfloat16)
            hv = h[:, fc1:].astype(jnp.bfloat16)
            hp2 = jnp.maximum(
                jnp.dot(hp, w2p_ref[...], preferred_element_type=jnp.float32)
                + b2_ref[:, :fc2], 0.0)
            hv2 = jnp.maximum(
                jnp.dot(hv, w2v_ref[...], preferred_element_type=jnp.float32)
                + b2_ref[:, fc2:], 0.0)
            out = (jnp.dot(hp2.astype(jnp.bfloat16), wh_ref[:fc2, :],
                           preferred_element_type=jnp.float32)
                   + jnp.dot(hv2.astype(jnp.bfloat16), wh_ref[fc2:, :],
                             preferred_element_type=jnp.float32)
                   + bh_ref[...])
        else:
            # Fused block-diagonal layer 2 (256-wide N -> one MXU tile on v6/v7).
            h2 = (jnp.dot(h.astype(jnp.bfloat16), w2_ref[...],
                          preferred_element_type=jnp.float32)
                  + b2_ref[...])
            h2 = jnp.maximum(h2, 0.0)
            # Fused heads -> lane-dense slab [mean | logstd | vf | 0 ...].
            out = (jnp.dot(h2.astype(jnp.bfloat16), wh_ref[...],
                           preferred_element_type=jnp.float32)
                   + bh_ref[...])

        # std = exp(logstd) on lanes [n_actions, 2*n_actions) only.
        # Static (1, out_w) mask; exp sits in the EUP slot (free filler) and is
        # discarded by the select on non-logstd lanes.
        lane = jax.lax.broadcasted_iota(jnp.int32, (1, out_w), 1)
        is_logstd = (lane >= n_actions) & (lane < 2 * n_actions)
        out = jnp.where(is_logstd, jnp.exp(out), out)

        out_ref[...] = out.astype(out_ref.dtype)

    return kernel


@jax.jit
def actor_critic_forward(obs, act, fused_params):
    """Fused actor-critic forward pass.  Returns (mean, vf, std) (bf16)."""
    B, obs_dim = obs.shape
    n_actions = act.shape[1]
    d_in = obs_dim + n_actions
    out_w = fused_params["wh"].shape[1]          # lane-dense head width (>=128)
    fc1x2 = fused_params["w1"].shape[1]          # 2 * fc1_dims
    fc2x2 = fused_params["wh"].shape[0]          # 2 * fc2_dims
    fc1, fc2 = fc1x2 // 2, fc2x2 // 2
    split_l2 = "w2p" in fused_params             # static dispatch (see fuse_params)

    TM = _pick_tm(B)
    B_pad = _round_up(B, TM)

    # concat + bf16 cast + pad fuse into a single XLA pass; halves input HBM read.
    x = jnp.concatenate([obs, act], axis=1).astype(jnp.bfloat16)
    if B_pad != B:
        x = jnp.pad(x, ((0, B_pad - B), (0, 0)))

    if split_l2:
        weights = (fused_params["w1"], fused_params["b1"],
                   fused_params["w2p"], fused_params["w2v"], fused_params["b2"],
                   fused_params["wh"], fused_params["bh"])
        l2_flops = 2 * fc1 * fc2
    else:
        weights = (fused_params["w1"], fused_params["b1"],
                   fused_params["w2"], fused_params["b2"],
                   fused_params["wh"], fused_params["bh"])
        l2_flops = fc1x2 * fc2x2

    batch_map = lambda i: (i, 0)
    const_map = lambda i: (0, 0)                 # weights stay VMEM-resident
    in_specs = [pl.BlockSpec((TM, d_in), batch_map)]
    in_specs += [pl.BlockSpec(w.shape, const_map) for w in weights]
    out_spec = pl.BlockSpec((TM, out_w), batch_map)

    flops = 2 * B_pad * (d_in * fc1x2 + l2_flops + fc2x2 * out_w)
    bytes_accessed = (x.size * 2 + B_pad * out_w * 2
                      + sum(int(w.size) * w.dtype.itemsize for w in weights))
    cost = pl.CostEstimate(flops=int(flops),
                           transcendentals=int(B_pad * n_actions),
                           bytes_accessed=int(bytes_accessed))

    slab = pl.pallas_call(
        _make_kernel(n_actions, out_w, fc1, fc2, split_l2),
        out_shape=jax.ShapeDtypeStruct((B_pad, out_w), jnp.bfloat16),
        grid=(B_pad // TM,),
        in_specs=in_specs,
        out_specs=out_spec,
        compiler_params=pltpu.CompilerParams(
            dimension_semantics=("parallel",)),
        cost_estimate=cost,
    )(x, *weights)

    mean = slab[:B, :n_actions]
    std = slab[:B, n_actions:2 * n_actions]
    vf = slab[:B, 2 * n_actions:2 * n_actions + 1]
    return mean, vf, std


def fuse_params(p, n_actions, fc1_dims, fc2_dims,
                weight_dtype=jnp.bfloat16, split_layer2=None):
    """Builds the fused bf16 weight slabs consumed by the kernel.

    split_layer2=None auto-detects: fused block-diag layer-2 on v6/v7 (256-wide
    MXU tile), two separate 128-wide halves on older generations.
    """
    if split_layer2 is None:
        split_layer2 = _should_split_layer2()
    out_w = max(128, _round_up(2 * n_actions + 1, 128))   # lane-dense head width

    # Layer 1: [d_in, 2*fc1] = [policy | value].
    w1 = jnp.concatenate([p["w1"], p["vw1"]], axis=1)
    b1 = jnp.concatenate([p["b1"], p["vb1"]], axis=1)

    # Layer 2: either block-diagonal [2*fc1, 2*fc2] or two halves.
    b2 = jnp.concatenate([p["b2"], p["vb2"]], axis=1)

    # Heads: one [2*fc2, out_w] matmul producing [mean | logstd | vf | 0...].
    wh = jnp.zeros((2 * fc2_dims, out_w), jnp.float32)
    wh = wh.at[:fc2_dims, 0:n_actions].set(p["wm"])
    wh = wh.at[:fc2_dims, n_actions:2 * n_actions].set(p["wls"])
    wh = wh.at[fc2_dims:, 2 * n_actions:2 * n_actions + 1].set(p["vwo"])
    bh = jnp.zeros((1, out_w), jnp.float32)
    bh = bh.at[:, 0:n_actions].set(p["bm"])
    bh = bh.at[:, n_actions:2 * n_actions].set(p["bls"])
    bh = bh.at[:, 2 * n_actions:2 * n_actions + 1].set(p["vbo"])

    fused = dict(
        w1=w1.astype(weight_dtype),
        b1=b1,                                   # biases stay f32
        b2=b2,
        wh=wh.astype(weight_dtype),
        bh=bh,
    )
    if split_layer2:
        fused["w2p"] = p["w2"].astype(weight_dtype)
        fused["w2v"] = p["vw2"].astype(weight_dtype)
    else:
        w2 = jnp.zeros((2 * fc1_dims, 2 * fc2_dims), jnp.float32)
        w2 = w2.at[:fc1_dims, :fc2_dims].set(p["w2"])
        w2 = w2.at[fc1_dims:, fc2_dims:].set(p["vw2"])
        fused["w2"] = w2.astype(weight_dtype)
    return fused


def init_params(key, input_dims, n_actions, fc1_dims=128, fc2_dims=128):
    """PyTorch-default init (uniform +-1/sqrt(fan_in)); fc_mean zero-init.

    Returns (raw, fused): raw f32 per-layer params (for the reference) and the
    fused bf16 slabs consumed by the Pallas kernel.  Weights are [in, out].
    """
    d_in = input_dims + n_actions

    def linear(k, fan_in, fan_out):
        kw, kb = jax.random.split(k)
        bound = 1.0 / math.sqrt(fan_in)
        w = jax.random.uniform(kw, (fan_in, fan_out), jnp.float32, -bound, bound)
        b = jax.random.uniform(kb, (1, fan_out), jnp.float32, -bound, bound)
        return w, b

    keys = jax.random.split(key, 6)
    w1, b1 = linear(keys[0], d_in, fc1_dims)
    w2, b2 = linear(keys[1], fc1_dims, fc2_dims)
    wls, bls = linear(keys[2], fc2_dims, n_actions)   # DiagGaussian log-std head
    vw1, vb1 = linear(keys[3], d_in, fc1_dims)
    vw2, vb2 = linear(keys[4], fc1_dims, fc2_dims)
    vwo, vbo = linear(keys[5], fc2_dims, 1)
    wm = jnp.zeros((fc2_dims, n_actions), jnp.float32)  # fc_mean zero-init
    bm = jnp.zeros((1, n_actions), jnp.float32)

    raw = dict(w1=w1, b1=b1, w2=w2, b2=b2, wm=wm, bm=bm, wls=wls, bls=bls,
               vw1=vw1, vb1=vb1, vw2=vw2, vb2=vb2, vwo=vwo, vbo=vbo)
    fused = fuse_params(raw, n_actions, fc1_dims, fc2_dims)
    return raw, fused


def _reference_forward(obs, act, p):
    """Pure-JAX f32 reference matching the PyTorch module."""
    ob = jnp.concatenate([obs, act], axis=1)
    h = jnp.maximum(ob @ p["w1"] + p["b1"], 0.0)
    h = jnp.maximum(h @ p["w2"] + p["b2"], 0.0)
    mean = h @ p["wm"] + p["bm"]
    std = jnp.exp(h @ p["wls"] + p["bls"])
    v = jnp.maximum(ob @ p["vw1"] + p["vb1"], 0.0)
    v = jnp.maximum(v @ p["vw2"] + p["vb2"], 0.0)
    vf = v @ p["vwo"] + p["vbo"]
    return mean, vf, std


if __name__ == "__main__":
    # Small shapes consistent with the module: obs dim 16, 4 actions,
    # hidden widths 128 (module default), batch 2.
    B, OBS_DIM, N_ACTIONS, FC1, FC2 = 2, 16, 4, 128, 128

    key = jax.random.PRNGKey(0)
    k_obs, k_act, k_par = jax.random.split(key, 3)
    obs = jax.random.normal(k_obs, (B, OBS_DIM), jnp.float32)
    act = jax.random.normal(k_act, (B, N_ACTIONS), jnp.float32)

    raw_params, fused_params = init_params(k_par, OBS_DIM, N_ACTIONS, FC1, FC2)

    mean, vf, std = actor_critic_forward(obs, act, fused_params)
    jax.block_until_ready((mean, vf, std))

    # Sanity check against a pure-JAX f32 reference (bf16 weights + bf16 output
    # slab -> loose tolerance).
    r_mean, r_vf, r_std = _reference_forward(obs, act, raw_params)
    assert mean.shape == (B, N_ACTIONS) and std.shape == (B, N_ACTIONS)
    assert vf.shape == (B, 1)
    assert jnp.allclose(mean.astype(jnp.float32), r_mean, atol=3e-2, rtol=3e-2)
    assert jnp.allclose(vf.astype(jnp.float32), r_vf, atol=3e-2, rtol=3e-2)
    assert jnp.allclose(std.astype(jnp.float32), r_std, atol=3e-2, rtol=3e-2)

    print("KERNEL_OK")
</pallas_src>

<mosaic_0001>
module attributes {stable_mosaic.version = 11 : i64} {
  func.func @kernel(%arg0: i32, %arg1: memref<16x20xbf16, #tpu.memory_space<vmem>>, %arg2: memref<20x256xbf16, #tpu.memory_space<vmem>>, %arg3: memref<1x256xf32, #tpu.memory_space<vmem>>, %arg4: memref<128x128xbf16, #tpu.memory_space<vmem>>, %arg5: memref<128x128xbf16, #tpu.memory_space<vmem>>, %arg6: memref<1x256xf32, #tpu.memory_space<vmem>>, %arg7: memref<256x128xbf16, #tpu.memory_space<vmem>>, %arg8: memref<1x128xf32, #tpu.memory_space<vmem>>, %arg9: memref<16x128xbf16, #tpu.memory_space<vmem>>) attributes {dimension_semantics = [#tpu.dimension_semantics<parallel>], iteration_bounds = array<i64: 1>, scalar_prefetch = 0 : i64, scratch_operands = 0 : i64, tpu.core_type = #tpu.core_type<tc>, window_params = [{transform_indices = @transform_0, window_bounds = array<i64: 16, 20>}, {pipeline_mode = #tpu.pipeline_mode<synchronous>, transform_indices = @transform_1, window_bounds = array<i64: 20, 256>}, {pipeline_mode = #tpu.pipeline_mode<synchronous>, transform_indices = @transform_2, window_bounds = array<i64: 1, 256>}, {pipeline_mode = #tpu.pipeline_mode<synchronous>, transform_indices = @transform_3, window_bounds = array<i64: 128, 128>}, {pipeline_mode = #tpu.pipeline_mode<synchronous>, transform_indices = @transform_4, window_bounds = array<i64: 128, 128>}, {pipeline_mode = #tpu.pipeline_mode<synchronous>, transform_indices = @transform_5, window_bounds = array<i64: 1, 256>}, {pipeline_mode = #tpu.pipeline_mode<synchronous>, transform_indices = @transform_6, window_bounds = array<i64: 256, 128>}, {pipeline_mode = #tpu.pipeline_mode<synchronous>, transform_indices = @transform_7, window_bounds = array<i64: 1, 128>}, {transform_indices = @transform_8, window_bounds = array<i64: 16, 128>}]} {
    %c0 = arith.constant 0 : index
    %c0_0 = arith.constant 0 : index
    %0 = vector.load %arg1[%c0, %c0_0] : memref<16x20xbf16, #tpu.memory_space<vmem>>, vector<16x20xbf16>
    %c0_1 = arith.constant 0 : index
    %c0_2 = arith.constant 0 : index
    %1 = vector.load %arg2[%c0_1, %c0_2] : memref<20x256xbf16, #tpu.memory_space<vmem>>, vector<20x256xbf16>
    %cst = arith.constant dense<0.000000e+00> : vector<16x256xf32>
    %2 = tpu.matmul %0, %1, %cst {dimension_numbers = #tpu.dot_dimension_numbers<[1], [0], [0], [1], [0, 0, 1, 1], [], []>} : vector<16x20xbf16>, vector<20x256xbf16>, vector<16x256xf32> -> vector<16x256xf32>
    %c0_3 = arith.constant 0 : index
    %c0_4 = arith.constant 0 : index
    %3 = vector.load %arg3[%c0_3, %c0_4] : memref<1x256xf32, #tpu.memory_space<vmem>>, vector<1x256xf32>
    %4 = vector.broadcast %3 : vector<1x256xf32> to vector<16x256xf32>
    %5 = arith.addf %2, %4 : vector<16x256xf32>
    %cst_5 = arith.constant 0.000000e+00 : f32
    %6 = vector.broadcast %cst_5 : f32 to vector<16x256xf32>
    %7 = arith.maximumf %5, %6 : vector<16x256xf32>
    %8 = vector.extract_strided_slice %7 {offsets = [0, 0], sizes = [16, 128], strides = [1, 1]} : vector<16x256xf32> to vector<16x128xf32>
    %9 = arith.truncf %8 : vector<16x128xf32> to vector<16x128xbf16>
    %10 = vector.extract_strided_slice %7 {offsets = [0, 128], sizes = [16, 128], strides = [1, 1]} : vector<16x256xf32> to vector<16x128xf32>
    %11 = arith.truncf %10 : vector<16x128xf32> to vector<16x128xbf16>
    %c0_6 = arith.constant 0 : index
    %c0_7 = arith.constant 0 : index
    %12 = vector.load %arg4[%c0_6, %c0_7] : memref<128x128xbf16, #tpu.memory_space<vmem>>, vector<128x128xbf16>
    %cst_8 = arith.constant dense<0.000000e+00> : vector<16x128xf32>
    %13 = tpu.matmul %9, %12, %cst_8 {dimension_numbers = #tpu.dot_dimension_numbers<[1], [0], [0], [1], [0, 0, 1, 1], [], []>} : vector<16x128xbf16>, vector<128x128xbf16>, vector<16x128xf32> -> vector<16x128xf32>
    %c0_9 = arith.constant 0 : index
    %c0_10 = arith.constant 0 : index
    %14 = vector.load %arg6[%c0_9, %c0_10] : memref<1x256xf32, #tpu.memory_space<vmem>>, vector<1x128xf32>
    %15 = vector.broadcast %14 : vector<1x128xf32> to vector<16x128xf32>
    %16 = arith.addf %13, %15 : vector<16x128xf32>
    %cst_11 = arith.constant 0.000000e+00 : f32
    %17 = vector.broadcast %cst_11 : f32 to vector<16x128xf32>
    %18 = arith.maximumf %16, %17 : vector<16x128xf32>
    %c0_12 = arith.constant 0 : index
    %c0_13 = arith.constant 0 : index
    %19 = vector.load %arg5[%c0_12, %c0_13] : memref<128x128xbf16, #tpu.memory_space<vmem>>, vector<128x128xbf16>
    %cst_14 = arith.constant dense<0.000000e+00> : vector<16x128xf32>
    %20 = tpu.matmul %11, %19, %cst_14 {dimension_numbers = #tpu.dot_dimension_numbers<[1], [0], [0], [1], [0, 0, 1, 1], [], []>} : vector<16x128xbf16>, vector<128x128xbf16>, vector<16x128xf32> -> vector<16x128xf32>
    %c0_15 = arith.constant 0 : index
    %c128 = arith.constant 128 : index
    %21 = vector.load %arg6[%c0_15, %c128] : memref<1x256xf32, #tpu.memory_space<vmem>>, vector<1x128xf32>
    %22 = vector.broadcast %21 : vector<1x128xf32> to vector<16x128xf32>
    %23 = arith.addf %20, %22 : vector<16x128xf32>
    %cst_16 = arith.constant 0.000000e+00 : f32
    %24 = vector.broadcast %cst_16 : f32 to vector<16x128xf32>
    %25 = arith.maximumf %23, %24 : vector<16x128xf32>
    %26 = arith.truncf %18 : vector<16x128xf32> to vector<16x128xbf16>
    %c0_17 = arith.constant 0 : index
    %c0_18 = arith.constant 0 : index
    %27 = vector.load %arg7[%c0_17, %c0_18] : memref<256x128xbf16, #tpu.memory_space<vmem>>, vector<128x128xbf16>
    %cst_19 = arith.constant dense<0.000000e+00> : vector<16x128xf32>
    %28 = tpu.matmul %26, %27, %cst_19 {dimension_numbers = #tpu.dot_dimension_numbers<[1], [0], [0], [1], [0, 0, 1, 1], [], []>} : vector<16x128xbf16>, vector<128x128xbf16>, vector<16x128xf32> -> vector<16x128xf32>
    %29 = arith.truncf %25 : vector<16x128xf32> to vector<16x128xbf16>
    %c128_20 = arith.constant 128 : index
    %c0_21 = arith.constant 0 : index
    %30 = vector.load %arg7[%c128_20, %c0_21] : memref<256x128xbf16, #tpu.memory_space<vmem>>, vector<128x128xbf16>
    %cst_22 = arith.constant dense<0.000000e+00> : vector<16x128xf32>
    %31 = tpu.matmul %29, %30, %cst_22 {dimension_numbers = #tpu.dot_dimension_numbers<[1], [0], [0], [1], [0, 0, 1, 1], [], []>} : vector<16x128xbf16>, vector<128x128xbf16>, vector<16x128xf32> -> vector<16x128xf32>
    %32 = arith.addf %28, %31 : vector<16x128xf32>
    %c0_23 = arith.constant 0 : index
    %c0_24 = arith.constant 0 : index
    %33 = vector.load %arg8[%c0_23, %c0_24] : memref<1x128xf32, #tpu.memory_space<vmem>>, vector<1x128xf32>
    %34 = vector.broadcast %33 : vector<1x128xf32> to vector<16x128xf32>
    %35 = arith.addf %32, %34 : vector<16x128xf32>
    %36 = tpu.iota {dimensions = array<i32: 1>} : vector<1x128xi32>
    %c4_i32 = arith.constant 4 : i32
    %37 = vector.broadcast %c4_i32 : i32 to vector<1x128xi32>
    %38 = arith.cmpi sge, %36, %37 : vector<1x128xi32>
    %c8_i32 = arith.constant 8 : i32
    %39 = vector.broadcast %c8_i32 : i32 to vector<1x128xi32>
    %40 = arith.cmpi slt, %36, %39 : vector<1x128xi32>
    %41 = arith.andi %38, %40 : vector<1x128xi1>
    %42 = math.exp %35 : vector<16x128xf32>
    %43 = vector.shape_cast %41 : vector<1x128xi1> to vector<1x128xi1>
    %44 = vector.broadcast %43 : vector<1x128xi1> to vector<16x128xi1>
    %45 = arith.select %44, %42, %35 : vector<16x128xi1>, vector<16x128xf32>
    %46 = arith.truncf %45 : vector<16x128xf32> to vector<16x128xbf16>
    %c0_25 = arith.constant 0 : index
    %c0_26 = arith.constant 0 : index
    %47 = vector.load %arg9[%c0_25, %c0_26] : memref<16x128xbf16, #tpu.memory_space<vmem>>, vector<16x128xbf16>
    tpu.vector_store %arg9[%c0_25, %c0_26], %46 {strides = array<i32>} : memref<16x128xbf16, #tpu.memory_space<vmem>>, vector<16x128xbf16>,
    return
  }
  func.func @transform_0(%arg0: i32) -> (i32, i32) {
    %c0_i32 = arith.constant 0 : i32
    %c0_i32_0 = arith.constant 0 : i32
    return %arg0, %c0_i32 : i32, i32
  }
  func.func @transform_1(%arg0: i32) -> (i32, i32) {
    %c0_i32 = arith.constant 0 : i32
    %c0_i32_0 = arith.constant 0 : i32
    %c0_i32_1 = arith.constant 0 : i32
    return %c0_i32, %c0_i32_0 : i32, i32
  }
  func.func @transform_2(%arg0: i32) -> (i32, i32) {
    %c0_i32 = arith.constant 0 : i32
    %c0_i32_0 = arith.constant 0 : i32
    %c0_i32_1 = arith.constant 0 : i32
    return %c0_i32, %c0_i32_0 : i32, i32
  }
  func.func @transform_3(%arg0: i32) -> (i32, i32) {
    %c0_i32 = arith.constant 0 : i32
    %c0_i32_0 = arith.constant 0 : i32
    %c0_i32_1 = arith.constant 0 : i32
    return %c0_i32, %c0_i32_0 : i32, i32
  }
  func.func @transform_4(%arg0: i32) -> (i32, i32) {
    %c0_i32 = arith.constant 0 : i32
    %c0_i32_0 = arith.constant 0 : i32
    %c0_i32_1 = arith.constant 0 : i32
    return %c0_i32, %c0_i32_0 : i32, i32
  }
  func.func @transform_5(%arg0: i32) -> (i32, i32) {
    %c0_i32 = arith.constant 0 : i32
    %c0_i32_0 = arith.constant 0 : i32
    %c0_i32_1 = arith.constant 0 : i32
    return %c0_i32, %c0_i32_0 : i32, i32
  }
  func.func @transform_6(%arg0: i32) -> (i32, i32) {
    %c0_i32 = arith.constant 0 : i32
    %c0_i32_0 = arith.constant 0 : i32
    %c0_i32_1 = arith.constant 0 : i32
    return %c0_i32, %c0_i32_0 : i32, i32
  }
  func.func @transform_7(%arg0: i32) -> (i32, i32) {
    %c0_i32 = arith.constant 0 : i32
    %c0_i32_0 = arith.constant 0 : i32
    %c0_i32_1 = arith.constant 0 : i32
    return %c0_i32, %c0_i32_0 : i32, i32
  }
  func.func @transform_8(%arg0: i32) -> (i32, i32) {
    %c0_i32 = arith.constant 0 : i32
    %c0_i32_0 = arith.constant 0 : i32
    return %arg0, %c0_i32 : i32, i32
  }
}

</mosaic_0001>

<llo_original>
// kernel: actor_critic_forward.1
$region0: #{actor_critic_forward.1}
  #allocation0 [shape = 'u32[]', space=smem, size = 0x4, offset = 0x4, fixed_abs, tag = 'smem constant byte address 0x4 - core index']
  #allocation1 [shape = 'u32[144,128]{1,0:T(1,128)}', space=vmem, size = 0x12000, scoped, tag = 'internal scratch']
  %s0 = inlined_call_operand.vmem [shape: bf16[16,20], index: 0, kind: input, shape index: {}]
  %s1 = inlined_call_operand.vmem [shape: bf16[20,256], index: 1, kind: input, shape index: {}]
  %s2 = inlined_call_operand.vmem [shape: f32[1,256], index: 2, kind: input, shape index: {}]
  %s3 = inlined_call_operand.hbm [shape: bf16[128,128], index: 3, kind: input, shape index: {}]
  %s4 = inlined_call_operand.hbm [shape: bf16[128,128], index: 4, kind: input, shape index: {}]
  %s5 = inlined_call_operand.vmem [shape: f32[1,256], index: 5, kind: input, shape index: {}]
  %s6 = inlined_call_operand.hbm [shape: bf16[256,128], index: 6, kind: input, shape index: {}]
  %s7 = inlined_call_operand.vmem [shape: f32[1,128], index: 7, kind: input, shape index: {}]
  %s8 = inlined_call_operand.vmem [shape: bf16[16,128], index: 8, kind: output, shape index: {}]
  %s9 = sld [smem:[#allocation0]]
  $region54: #{actor_critic_forward.1} parent=0
    _
  %s11 = ssub.s32 1, %s9
  %s12 = scalar_select 0, %s11, %s9
  $region1: #{actor_critic_forward.1} parent=0
    #allocation2 [shape = 'u8[32768]{0}', space=vmem, size = 0x8000, scoped, tag = 'input window, operand 3, single buffered']
    #allocation3 [shape = 's32[1]{0}', space=sflag, size = 0x4, scoped, tag = 'scoped memory for actor_critic_forward.1']
    #allocation4 [shape = 'u8[32768]{0}', space=vmem, size = 0x8000, scoped, tag = 'input window, operand 4, single buffered']
    #allocation5 [shape = 's32[1]{0}', space=sflag, size = 0x4, scoped, tag = 'scoped memory for actor_critic_forward.1']
    #allocation6 [shape = 'u8[65536]{0}', space=vmem, size = 0x10000, scoped, tag = 'input window, operand 6, single buffered']
    %13 = vsyncpa [#allocation3], 0
    %14 = vsyncpa [#allocation5], 0
    // Predicated region
    $region2: #{actor_critic_forward.1} parent=1 // pred_check
      _
    $region3: #{actor_critic_forward.1} parent=1 // pred_check_branch
      %16 = sbr.rel (0) target = $region5
    $region4: #{actor_critic_forward.1} parent=1 // pred_region
      _
    $region5: #{actor_critic_forward.1} parent=1 // pred_fallthru
      _
    // Predicated region
    $region6: #{actor_critic_forward.1} parent=1 // pred_check
      _
    $region7: #{actor_critic_forward.1} parent=1 // pred_check_branch
      %18 = sbr.rel (0) target = $region9
    $region8: #{actor_critic_forward.1} parent=1 // pred_region
      _
    $region9: #{actor_critic_forward.1} parent=1 // pred_fallthru
      _
    // Predicated region
    $region10: #{actor_critic_forward.1} parent=1 // pred_check
      _
    $region11: #{actor_critic_forward.1} parent=1 // pred_check_branch
      %20 = sbr.rel (0) target = $region13
    $region12: #{actor_critic_forward.1} parent=1 // pred_region
      _
    $region13: #{actor_critic_forward.1} parent=1 // pred_fallthru
      _
    // Predicated region
    $region14: #{actor_critic_forward.1} parent=1 // pred_check
      _
    $region15: #{actor_critic_forward.1} parent=1 // pred_check_branch
      %22 = sbr.rel (0) target = $region17
    $region16: #{actor_critic_forward.1} parent=1 // pred_region
      %s24 = ssub.s32 1024, 1024
      %25 = vsyncadd [#allocation3], %s24
      %s26 = sshll.u32 [#allocation2], 4
      %s27 = int_to_ptr.vmem [resolvable:$true] %s26
      %32 = dma.hbm_to_vmem [thread:$0]  %s3, 1024, %s27, [#allocation3], 64, 64, 4
    $region17: #{actor_critic_forward.1} parent=1 // pred_fallthru
      _
    // Predicated region
    $region18: #{actor_critic_forward.1} parent=1 // pred_check
      _
    $region19: #{actor_critic_forward.1} parent=1 // pred_check_branch
      %34 = sbr.rel (0) target = $region21
    $region20: #{actor_critic_forward.1} parent=1 // pred_region
      %s36 = ssub.s32 1024, 1024
      %37 = vsyncadd [#allocation5], %s36
      %s38 = sshll.u32 [#allocation4], 4
      %s39 = int_to_ptr.vmem [resolvable:$true] %s38
      %44 = dma.hbm_to_vmem [thread:$0]  %s4, 1024, %s39, [#allocation5], 64, 64, 4
    $region21: #{actor_critic_forward.1} parent=1 // pred_fallthru
      _
    // Predicated region
    $region22: #{actor_critic_forward.1} parent=1 // pred_check
      _
    $region23: #{actor_critic_forward.1} parent=1 // pred_check_branch
      %46 = sbr.rel (0) target = $region25
    $region24: #{actor_critic_forward.1} parent=1 // pred_region
      _
    $region25: #{actor_critic_forward.1} parent=1 // pred_fallthru
      _
    // Predicated region
    $region26: #{actor_critic_forward.1} parent=1 // pred_check
      _
    $region27: #{actor_critic_forward.1} parent=1 // pred_check_branch
      %48 = sbr.rel (0) target = $region29
    $region28: #{actor_critic_forward.1} parent=1 // pred_region
      %s50 = ssub.s32 2048, 2048
      %51 = vsyncadd [#allocation5], %s50
      %s52 = sshll.u32 [#allocation6], 4
      %s53 = int_to_ptr.vmem [resolvable:$true] %s52
      %58 = dma.hbm_to_vmem [thread:$0]  %s6, 2048, %s53, [#allocation5], 64, 64, 4
    $region29: #{actor_critic_forward.1} parent=1 // pred_fallthru
      _
    // Predicated region
    $region30: #{actor_critic_forward.1} parent=1 // pred_check
      _
    $region31: #{actor_critic_forward.1} parent=1 // pred_check_branch
      %60 = sbr.rel (0) target = $region33
    $region32: #{actor_critic_forward.1} parent=1 // pred_region
      _
    $region33: #{actor_critic_forward.1} parent=1 // pred_fallthru
      _
    // Predicated region
    $region34: #{actor_critic_forward.1} parent=1 // pred_check
      _
    $region35: #{actor_critic_forward.1} parent=1 // pred_check_branch
      %62 = sbr.rel (0) target = $region37
    $region36: #{actor_critic_forward.1} parent=1 // pred_region
      %63 = dma.done [#allocation3], 1024
    $region37: #{actor_critic_forward.1} parent=1 // pred_fallthru
      _
    // Predicated region
    $region38: #{actor_critic_forward.1} parent=1 // pred_check
      _
    $region39: #{actor_critic_forward.1} parent=1 // pred_check_branch
      %65 = sbr.rel (0) target = $region41
    $region40: #{actor_critic_forward.1} parent=1 // pred_region
      %66 = dma.done [#allocation5], 1024
    $region41: #{actor_critic_forward.1} parent=1 // pred_fallthru
      _
    // Predicated region
    $region42: #{actor_critic_forward.1} parent=1 // pred_check
      _
    $region43: #{actor_critic_forward.1} parent=1 // pred_check_branch
      %68 = sbr.rel (0) target = $region45
    $region44: #{actor_critic_forward.1} parent=1 // pred_region
      %69 = dma.done [#allocation5], 2048
    $region45: #{actor_critic_forward.1} parent=1 // pred_fallthru
      _
    %v71 = vld [vmem:[%s0] sm:$0xf]
    %v72 = vld [vmem:[%s0 + $0x4] sm:$0xf]
    %v73 = vld [vmem:[%s1] sm:$0xff]
    %v74 = vld [vmem:[%s1 + $0x8] sm:$0xff]
    %v75 = vld [vmem:[%s1 + $0x10] sm:$0x33]
    %v76 = vld [vmem:[%s2] sm:$0x3]
    %v78 = vlaneseq
    %v79 = vshrl.u32 %v78, 7
    %v80 = vsub.s32 0, %v79
    %v81 = vrot.slane %v76, %v80
    %v82 = vlaneseq
    %v83 = vshrl.u32 %v82, 7
    %v84 = vsub.s32 1, %v83
    %v85 = vrot.slane %v76, %v84
    %v90 = vunpack.c.l.b16 %v71
    %v91 = vunpack.c.l.b16 %v72
    %v92 = vpack.c.b16 %v91, %v90
    %v96 = vunpack.c.l.b16 %v73
    %v97 = vunpack.c.h.b16 %v73
    %v98 = vunpack.c.l.b16 %v74
    %v99 = vunpack.c.h.b16 %v74
    %v100 = vunpack.c.l.b16 %v75
    %v101 = vunpack.c.h.b16 %v75
    %v102 = vpack.c.b16 %v98, %v96
    %v103 = vpack.c.b16 %v99, %v97
    %v104 = vpack.c.b16 %v100, %v100
    %v105 = vpack.c.b16 %v101, %v101
    %vm108 = vcmask 162816
    %v110 = vsel %vm108, %v92, 0
    %vm112 = vcmask 1041408
    %v114 = vsel %vm112, %v104, 0
    %v117 = vsel %vm112, %v105, 0
    %119 = vmatprep.subr.bf16.mxu0 %v103
    %120 = vmatpush1.bf16.msra.mxu0 %v102
    %121 = vmatprep.subr.bf16.mxu0 %v117
    %122 = vmatpush1.bf16.msra.mxu0 %v114
    %123 = vmatprep.subr.bf16.mxu0 0
    %124 = vmatpush1.bf16.msra.mxu0 0
    %125 = vmatprep.subr.bf16.mxu0 0
    %126 = vmatpush1.bf16.msra.mxu0 0
    %127 = vmatprep.subr.bf16.mxu0 0
    %128 = vmatpush1.bf16.msra.mxu0 0
    %129 = vmatprep.subr.bf16.mxu0 0
    %130 = vmatpush1.bf16.msra.mxu0 0
    %131 = vmatprep.subr.bf16.mxu0 0
    %132 = vmatpush1.bf16.msra.mxu0 0
    %133 = vmatprep.subr.bf16.mxu0 0
    %134 = vmatpush1.bf16.msra.mxu0 0
    %135 = vmatprep.subr.bf16.mxu0 0
    %136 = vmatpush1.bf16.msra.mxu0 0
    %137 = vmatprep.subr.bf16.mxu0 0
    %138 = vmatpush1.bf16.msra.mxu0 0
    %139 = vmatprep.subr.bf16.mxu0 0
    %140 = vmatpush1.bf16.msra.mxu0 0
    %141 = vmatprep.subr.bf16.mxu0 0
    %142 = vmatpush1.bf16.msra.mxu0 0
    %143 = vmatprep.subr.bf16.mxu0 0
    %144 = vmatpush1.bf16.msra.mxu0 0
    %145 = vmatprep.subr.bf16.mxu0 0
    %146 = vmatpush1.bf16.msra.mxu0 0
    %147 = vmatprep.subr.bf16.mxu0 0
    %148 = vmatpush1.bf16.msra.mxu0 0
    %149 = vmatprep.subr.bf16.mxu0 0
    %150 = vmatpush1.bf16.msra.mxu0 0
    %151 = vmatprep.mubr.bf16.mxu0 0
    %152 = vmatmul.mubr.bf16.gmra.mrb[0].mxu0 %v110
    %v153 = vpop.f32.mrb[0].mxu0
    %v154 = vadd.f32 %v81, %v153
    %v155 = vpop.f32.mrb[0].mxu0
    %v156 = vadd.f32 %v85, %v155
    %v157 = vpop.f32.mrb[0].mxu0
    %v158 = vadd.f32 %v81, %v157
    %v159 = vpop.f32.mrb[0].mxu0
    %v160 = vadd.f32 %v85, %v159
    %161 = vdwg.mxu0
    %v162 = vmax.f32 %v154, 0.0
    %v163 = vmax.f32 %v156, 0.0
    %v164 = vmax.f32 %v158, 0.0
    %v165 = vmax.f32 %v160, 0.0
    %v166 = vpack.c.bf16 %v164, %v162
    %v167 = vpack.c.bf16 %v165, %v163
    %v168 = vld [vmem:[#allocation2] sm:$0xf]
    %v169 = vld [vmem:[#allocation2 + $0x4] sm:$0xf]
    %v170 = vld [vmem:[#allocation2 + $0x8] sm:$0xf]
    %v171 = vld [vmem:[#allocation2 + $0xc] sm:$0xf]
    %v172 = vld [vmem:[#allocation2 + $0x10] sm:$0xf]
    %v173 = vld [vmem:[#allocation2 + $0x14] sm:$0xf]
    %v174 = vld [vmem:[#allocation2 + $0x18] sm:$0xf]
    %v175 = vld [vmem:[#allocation2 + $0x1c] sm:$0xf]
    %v176 = vld [vmem:[#allocation2 + $0x20] sm:$0xf]
    %v177 = vld [vmem:[#allocation2 + $0x24] sm:$0xf]
    %v178 = vld [vmem:[#allocation2 + $0x28] sm:$0xf]
    %v179 = vld [vmem:[#allocation2 + $0x2c] sm:$0xf]
    %v180 = vld [vmem:[#allocation2 + $0x30] sm:$0xf]
    %v181 = vld [vmem:[#allocation2 + $0x34] sm:$0xf]
    %v182 = vld [vmem:[#allocation2 + $0x38] sm:$0xf]
    %v183 = vld [vmem:[#allocation2 + $0x3c] sm:$0xf]
    %v184 = vld [vmem:[%s5] sm:$0x1]
    %v186 = vlaneseq
    %v187 = vshrl.u32 %v186, 7
    %v188 = vsub.s32 0, %v187
    %v189 = vrot.slane %v184, %v188
    %v207 = vunpack.c.l.b16 %v168
    %v208 = vunpack.c.l.b16 %v169
    %v209 = vunpack.c.l.b16 %v170
    %v210 = vunpack.c.l.b16 %v171
    %v211 = vunpack.c.l.b16 %v172
    %v212 = vunpack.c.l.b16 %v173
    %v213 = vunpack.c.l.b16 %v174
    %v214 = vunpack.c.l.b16 %v175
    %v215 = vunpack.c.l.b16 %v176
    %v216 = vunpack.c.l.b16 %v177
    %v217 = vunpack.c.l.b16 %v178
    %v218 = vunpack.c.l.b16 %v179
    %v219 = vunpack.c.l.b16 %v180
    %v220 = vunpack.c.l.b16 %v181
    %v221 = vunpack.c.l.b16 %v182
    %v222 = vunpack.c.l.b16 %v183
    %v223 = vpack.c.b16 %v208, %v207
    %v224 = vpack.c.b16 %v210, %v209
    %v225 = vpack.c.b16 %v212, %v211
    %v226 = vpack.c.b16 %v214, %v213
    %v227 = vpack.c.b16 %v216, %v215
    %v228 = vpack.c.b16 %v218, %v217
    %v229 = vpack.c.b16 %v220, %v219
    %v230 = vpack.c.b16 %v222, %v221
    %239 = vmatprep.subr.bf16.mxu0 0
    %240 = vmatpush1.bf16.msra.mxu0 %v223
    %241 = vmatprep.subr.bf16.mxu0 0
    %242 = vmatpush1.bf16.msra.mxu0 %v224
    %243 = vmatprep.subr.bf16.mxu0 0
    %244 = vmatpush1.bf16.msra.mxu0 %v225
    %245 = vmatprep.subr.bf16.mxu0 0
    %246 = vmatpush1.bf16.msra.mxu0 %v226
    %247 = vmatprep.subr.bf16.mxu0 0
    %248 = vmatpush1.bf16.msra.mxu0 %v227
    %249 = vmatprep.subr.bf16.mxu0 0
    %250 = vmatpush1.bf16.msra.mxu0 %v228
    %251 = vmatprep.subr.bf16.mxu0 0
    %252 = vmatpush1.bf16.msra.mxu0 %v229
    %253 = vmatprep.subr.bf16.mxu0 0
    %254 = vmatpush1.bf16.msra.mxu0 %v230
    %255 = vmatprep.subr.bf16.mxu0 0
    %256 = vmatpush1.bf16.msra.mxu0 0
    %257 = vmatprep.subr.bf16.mxu0 0
    %258 = vmatpush1.bf16.msra.mxu0 0
    %259 = vmatprep.subr.bf16.mxu0 0
    %260 = vmatpush1.bf16.msra.mxu0 0
    %261 = vmatprep.subr.bf16.mxu0 0
    %262 = vmatpush1.bf16.msra.mxu0 0
    %263 = vmatprep.subr.bf16.mxu0 0
    %264 = vmatpush1.bf16.msra.mxu0 0
    %265 = vmatprep.subr.bf16.mxu0 0
    %266 = vmatpush1.bf16.msra.mxu0 0
    %267 = vmatprep.subr.bf16.mxu0 0
    %268 = vmatpush1.bf16.msra.mxu0 0
    %269 = vmatprep.subr.bf16.mxu0 0
    %270 = vmatpush1.bf16.msra.mxu0 0
    %271 = vmatprep.mubr.bf16.mxu0 0
    %272 = vmatmul.mubr.bf16.gmra.mrb[0].mxu0 %v166
    %v273 = vpop.f32.mrb[0].mxu0
    %v274 = vadd.f32 %v189, %v273
    %v275 = vpop.f32.mrb[0].mxu0
    %v276 = vpop.f32.mrb[0].mxu0
    %v277 = vadd.f32 %v189, %v276
    %v278 = vpop.f32.mrb[0].mxu0
    %279 = vdwg.mxu0
    %v280 = vmax.f32 %v274, 0.0
    %v281 = vmax.f32 %v277, 0.0
    %v282 = vld [vmem:[#allocation4] sm:$0xf]
    %v283 = vld [vmem:[#allocation4 + $0x4] sm:$0xf]
    %v284 = vld [vmem:[#allocation4 + $0x8] sm:$0xf]
    %v285 = vld [vmem:[#allocation4 + $0xc] sm:$0xf]
    %v286 = vld [vmem:[#allocation4 + $0x10] sm:$0xf]
    %v287 = vld [vmem:[#allocation4 + $0x14] sm:$0xf]
    %v288 = vld [vmem:[#allocation4 + $0x18] sm:$0xf]
    %v289 = vld [vmem:[#allocation4 + $0x1c] sm:$0xf]
    %v290 = vld [vmem:[#allocation4 + $0x20] sm:$0xf]
    %v291 = vld [vmem:[#allocation4 + $0x24] sm:$0xf]
    %v292 = vld [vmem:[#allocation4 + $0x28] sm:$0xf]
    %v293 = vld [vmem:[#allocation4 + $0x2c] sm:$0xf]
    %v294 = vld [vmem:[#allocation4 + $0x30] sm:$0xf]
    %v295 = vld [vmem:[#allocation4 + $0x34] sm:$0xf]
    %v296 = vld [vmem:[#allocation4 + $0x38] sm:$0xf]
    %v297 = vld [vmem:[#allocation4 + $0x3c] sm:$0xf]
    %v298 = vld [vmem:[%s5 + $0x1] sm:$0x1]
    %v300 = vlaneseq
    %v301 = vshrl.u32 %v300, 7
    %v302 = vsub.s32 0, %v301
    %v303 = vrot.slane %v298, %v302
    %v321 = vunpack.c.l.b16 %v282
    %v322 = vunpack.c.l.b16 %v283
    %v323 = vunpack.c.l.b16 %v284
    %v324 = vunpack.c.l.b16 %v285
    %v325 = vunpack.c.l.b16 %v286
    %v326 = vunpack.c.l.b16 %v287
    %v327 = vunpack.c.l.b16 %v288
    %v328 = vunpack.c.l.b16 %v289
    %v329 = vunpack.c.l.b16 %v290
    %v330 = vunpack.c.l.b16 %v291
    %v331 = vunpack.c.l.b16 %v292
    %v332 = vunpack.c.l.b16 %v293
    %v333 = vunpack.c.l.b16 %v294
    %v334 = vunpack.c.l.b16 %v295
    %v335 = vunpack.c.l.b16 %v296
    %v336 = vunpack.c.l.b16 %v297
    %v337 = vpack.c.b16 %v322, %v321
    %v338 = vpack.c.b16 %v324, %v323
    %v339 = vpack.c.b16 %v326, %v325
    %v340 = vpack.c.b16 %v328, %v327
    %v341 = vpack.c.b16 %v330, %v329
    %v342 = vpack.c.b16 %v332, %v331
    %v343 = vpack.c.b16 %v334, %v333
    %v344 = vpack.c.b16 %v336, %v335
    %353 = vmatprep.subr.bf16.mxu0 0
    %354 = vmatpush1.bf16.msra.mxu0 %v337
    %355 = vmatprep.subr.bf16.mxu0 0
    %356 = vmatpush1.bf16.msra.mxu0 %v338
    %357 = vmatprep.subr.bf16.mxu0 0
    %358 = vmatpush1.bf16.msra.mxu0 %v339
    %359 = vmatprep.subr.bf16.mxu0 0
    %360 = vmatpush1.bf16.msra.mxu0 %v340
    %361 = vmatprep.subr.bf16.mxu0 0
    %362 = vmatpush1.bf16.msra.mxu0 %v341
    %363 = vmatprep.subr.bf16.mxu0 0
    %364 = vmatpush1.bf16.msra.mxu0 %v342
    %365 = vmatprep.subr.bf16.mxu0 0
    %366 = vmatpush1.bf16.msra.mxu0 %v343
    %367 = vmatprep.subr.bf16.mxu0 0
    %368 = vmatpush1.bf16.msra.mxu0 %v344
    %369 = vmatprep.subr.bf16.mxu0 0
    %370 = vmatpush1.bf16.msra.mxu0 0
    %371 = vmatprep.subr.bf16.mxu0 0
    %372 = vmatpush1.bf16.msra.mxu0 0
    %373 = vmatprep.subr.bf16.mxu0 0
    %374 = vmatpush1.bf16.msra.mxu0 0
    %375 = vmatprep.subr.bf16.mxu0 0
    %376 = vmatpush1.bf16.msra.mxu0 0
    %377 = vmatprep.subr.bf16.mxu0 0
    %378 = vmatpush1.bf16.msra.mxu0 0
    %379 = vmatprep.subr.bf16.mxu0 0
    %380 = vmatpush1.bf16.msra.mxu0 0
    %381 = vmatprep.subr.bf16.mxu0 0
    %382 = vmatpush1.bf16.msra.mxu0 0
    %383 = vmatprep.subr.bf16.mxu0 0
    %384 = vmatpush1.bf16.msra.mxu0 0
    %385 = vmatprep.mubr.bf16.mxu0 0
    %386 = vmatmul.mubr.bf16.gmra.mrb[0].mxu0 %v167
    %v387 = vpop.f32.mrb[0].mxu0
    %v388 = vadd.f32 %v303, %v387
    %v389 = vpop.f32.mrb[0].mxu0
    %v390 = vpop.f32.mrb[0].mxu0
    %v391 = vadd.f32 %v303, %v390
    %v392 = vpop.f32.mrb[0].mxu0
    %393 = vdwg.mxu0
    %v394 = vmax.f32 %v388, 0.0
    %v395 = vmax.f32 %v391, 0.0
    %v396 = vpack.c.bf16 %v281, %v280
    %v397 = vld [vmem:[#allocation6] sm:$0xf]
    %v398 = vld [vmem:[#allocation6 + $0x4] sm:$0xf]
    %v399 = vld [vmem:[#allocation6 + $0x8] sm:$0xf]
    %v400 = vld [vmem:[#allocation6 + $0xc] sm:$0xf]
    %v401 = vld [vmem:[#allocation6 + $0x10] sm:$0xf]
    %v402 = vld [vmem:[#allocation6 + $0x14] sm:$0xf]
    %v403 = vld [vmem:[#allocation6 + $0x18] sm:$0xf]
    %v404 = vld [vmem:[#allocation6 + $0x1c] sm:$0xf]
    %v405 = vld [vmem:[#allocation6 + $0x20] sm:$0xf]
    %v406 = vld [vmem:[#allocation6 + $0x24] sm:$0xf]
    %v407 = vld [vmem:[#allocation6 + $0x28] sm:$0xf]
    %v408 = vld [vmem:[#allocation6 + $0x2c] sm:$0xf]
    %v409 = vld [vmem:[#allocation6 + $0x30] sm:$0xf]
    %v410 = vld [vmem:[#allocation6 + $0x34] sm:$0xf]
    %v411 = vld [vmem:[#allocation6 + $0x38] sm:$0xf]
    %v412 = vld [vmem:[#allocation6 + $0x3c] sm:$0xf]
    %v413 = vpack.c.bf16 %v395, %v394
    %v414 = vld [vmem:[#allocation6 + $0x40] sm:$0xf]
    %v415 = vld [vmem:[#allocation6 + $0x44] sm:$0xf]
    %v416 = vld [vmem:[#allocation6 + $0x48] sm:$0xf]
    %v417 = vld [vmem:[#allocation6 + $0x4c] sm:$0xf]
    %v418 = vld [vmem:[#allocation6 + $0x50] sm:$0xf]
    %v419 = vld [vmem:[#allocation6 + $0x54] sm:$0xf]
    %v420 = vld [vmem:[#allocation6 + $0x58] sm:$0xf]
    %v421 = vld [vmem:[#allocation6 + $0x5c] sm:$0xf]
    %v422 = vld [vmem:[#allocation6 + $0x60] sm:$0xf]
    %v423 = vld [vmem:[#allocation6 + $0x64] sm:$0xf]
    %v424 = vld [vmem:[#allocation6 + $0x68] sm:$0xf]
    %v425 = vld [vmem:[#allocation6 + $0x6c] sm:$0xf]
    %v426 = vld [vmem:[#allocation6 + $0x70] sm:$0xf]
    %v427 = vld [vmem:[#allocation6 + $0x74] sm:$0xf]
    %v428 = vld [vmem:[#allocation6 + $0x78] sm:$0xf]
    %v429 = vld [vmem:[#allocation6 + $0x7c] sm:$0xf]
    %v446 = vunpack.c.l.b16 %v414
    %v447 = vunpack.c.l.b16 %v415
    %v448 = vunpack.c.l.b16 %v416
    %v449 = vunpack.c.l.b16 %v417
    %v450 = vunpack.c.l.b16 %v418
    %v451 = vunpack.c.l.b16 %v419
    %v452 = vunpack.c.l.b16 %v420
    %v453 = vunpack.c.l.b16 %v421
    %v454 = vunpack.c.l.b16 %v422
    %v455 = vunpack.c.l.b16 %v423
    %v456 = vunpack.c.l.b16 %v424
    %v457 = vunpack.c.l.b16 %v425
    %v458 = vunpack.c.l.b16 %v426
    %v459 = vunpack.c.l.b16 %v427
    %v460 = vunpack.c.l.b16 %v428
    %v461 = vunpack.c.l.b16 %v429
    %v462 = vpack.c.b16 %v447, %v446
    %v463 = vpack.c.b16 %v449, %v448
    %v464 = vpack.c.b16 %v451, %v450
    %v465 = vpack.c.b16 %v453, %v452
    %v466 = vpack.c.b16 %v455, %v454
    %v467 = vpack.c.b16 %v457, %v456
    %v468 = vpack.c.b16 %v459, %v458
    %v469 = vpack.c.b16 %v461, %v460
    %478 = vmatprep.subr.bf16.mxu0 0
    %479 = vmatpush1.bf16.msra.mxu0 %v462
    %480 = vmatprep.subr.bf16.mxu0 0
    %481 = vmatpush1.bf16.msra.mxu0 %v463
    %482 = vmatprep.subr.bf16.mxu0 0
    %483 = vmatpush1.bf16.msra.mxu0 %v464
    %484 = vmatprep.subr.bf16.mxu0 0
    %485 = vmatpush1.bf16.msra.mxu0 %v465
    %486 = vmatprep.subr.bf16.mxu0 0
    %487 = vmatpush1.bf16.msra.mxu0 %v466
    %488 = vmatprep.subr.bf16.mxu0 0
    %489 = vmatpush1.bf16.msra.mxu0 %v467
    %490 = vmatprep.subr.bf16.mxu0 0
    %491 = vmatpush1.bf16.msra.mxu0 %v468
    %492 = vmatprep.subr.bf16.mxu0 0
    %493 = vmatpush1.bf16.msra.mxu0 %v469
    %494 = vmatprep.subr.bf16.mxu0 0
    %495 = vmatpush1.bf16.msra.mxu0 0
    %496 = vmatprep.subr.bf16.mxu0 0
    %497 = vmatpush1.bf16.msra.mxu0 0
    %498 = vmatprep.subr.bf16.mxu0 0
    %499 = vmatpush1.bf16.msra.mxu0 0
    %500 = vmatprep.subr.bf16.mxu0 0
    %501 = vmatpush1.bf16.msra.mxu0 0
    %502 = vmatprep.subr.bf16.mxu0 0
    %503 = vmatpush1.bf16.msra.mxu0 0
    %504 = vmatprep.subr.bf16.mxu0 0
    %505 = vmatpush1.bf16.msra.mxu0 0
    %506 = vmatprep.subr.bf16.mxu0 0
    %507 = vmatpush1.bf16.msra.mxu0 0
    %508 = vmatprep.subr.bf16.mxu0 0
    %509 = vmatpush1.bf16.msra.mxu0 0
    %510 = vmatprep.mubr.bf16.mxu0 0
    %511 = vmatmul.mubr.bf16.gmra.mrb[0].mxu0 %v413
    %v512 = vpop.f32.mrb[0].mxu0
    %v513 = vadd.f32 0.0, %v512
    %v514 = vpop.f32.mrb[0].mxu0
    %v515 = vpop.f32.mrb[0].mxu0
    %v516 = vadd.f32 0.0, %v515
    %v517 = vpop.f32.mrb[0].mxu0
    %518 = vdwg.mxu0
    %v535 = vunpack.c.l.b16 %v397
    %v536 = vunpack.c.l.b16 %v398
    %v537 = vunpack.c.l.b16 %v399
    %v538 = vunpack.c.l.b16 %v400
    %v539 = vunpack.c.l.b16 %v401
    %v540 = vunpack.c.l.b16 %v402
    %v541 = vunpack.c.l.b16 %v403
    %v542 = vunpack.c.l.b16 %v404
    %v543 = vunpack.c.l.b16 %v405
    %v544 = vunpack.c.l.b16 %v406
    %v545 = vunpack.c.l.b16 %v407
    %v546 = vunpack.c.l.b16 %v408
    %v547 = vunpack.c.l.b16 %v409
    %v548 = vunpack.c.l.b16 %v410
    %v549 = vunpack.c.l.b16 %v411
    %v550 = vunpack.c.l.b16 %v412
    %v551 = vpack.c.b16 %v536, %v535
    %v552 = vpack.c.b16 %v538, %v537
    %v553 = vpack.c.b16 %v540, %v539
    %v554 = vpack.c.b16 %v542, %v541
    %v555 = vpack.c.b16 %v544, %v543
    %v556 = vpack.c.b16 %v546, %v545
    %v557 = vpack.c.b16 %v548, %v547
    %v558 = vpack.c.b16 %v550, %v549
    %567 = vmatprep.subr.bf16.mxu0 0
    %568 = vmatpush1.bf16.msra.mxu0 %v551
    %569 = vmatprep.subr.bf16.mxu0 0
    %570 = vmatpush1.bf16.msra.mxu0 %v552
    %571 = vmatprep.subr.bf16.mxu0 0
    %572 = vmatpush1.bf16.msra.mxu0 %v553
    %573 = vmatprep.subr.bf16.mxu0 0
    %574 = vmatpush1.bf16.msra.mxu0 %v554
    %575 = vmatprep.subr.bf16.mxu0 0
    %576 = vmatpush1.bf16.msra.mxu0 %v555
    %577 = vmatprep.subr.bf16.mxu0 0
    %578 = vmatpush1.bf16.msra.mxu0 %v556
    %579 = vmatprep.subr.bf16.mxu0 0
    %580 = vmatpush1.bf16.msra.mxu0 %v557
    %581 = vmatprep.subr.bf16.mxu0 0
    %582 = vmatpush1.bf16.msra.mxu0 %v558
    %583 = vmatprep.subr.bf16.mxu0 0
    %584 = vmatpush1.bf16.msra.mxu0 0
    %585 = vmatprep.subr.bf16.mxu0 0
    %586 = vmatpush1.bf16.msra.mxu0 0
    %587 = vmatprep.subr.bf16.mxu0 0
    %588 = vmatpush1.bf16.msra.mxu0 0
    %589 = vmatprep.subr.bf16.mxu0 0
    %590 = vmatpush1.bf16.msra.mxu0 0
    %591 = vmatprep.subr.bf16.mxu0 0
    %592 = vmatpush1.bf16.msra.mxu0 0
    %593 = vmatprep.subr.bf16.mxu0 0
    %594 = vmatpush1.bf16.msra.mxu0 0
    %595 = vmatprep.subr.bf16.mxu0 0
    %596 = vmatpush1.bf16.msra.mxu0 0
    %597 = vmatprep.subr.bf16.mxu0 0
    %598 = vmatpush1.bf16.msra.mxu0 0
    %599 = vmatprep.mubr.bf16.mxu0 0
    %600 = vmatmul.mubr.bf16.gmra.mrb[0].mxu0 %v396
    %v601 = vpop.f32.mrb[0].mxu0
    %v602 = vadd.f32 %v513, %v601
    %v603 = vpop.f32.mrb[0].mxu0
    %v604 = vpop.f32.mrb[0].mxu0
    %v605 = vadd.f32 %v516, %v604
    %v606 = vpop.f32.mrb[0].mxu0
    %607 = vdwg.mxu0
    %v608 = vld [vmem:[%s7] sm:$0x1]
    %v610 = vlaneseq
    %v611 = vshrl.u32 %v610, 7
    %v612 = vsub.s32 0, %v611
    %v613 = vrot.slane %v608, %v612
    %v615 = vadd.f32 %v602, %v613
    %v616 = vadd.f32 %v605, %v613
    %v617 = vlaneseq
    %v618 = vand.u32 %v617, 127
    %vm619 = vcmp.ge.s32.totalorder %v618, 4
    %vm620 = vcmp.lt.s32.totalorder %v618, 8
    %vm621 = vmand %vm619, %vm620
    %v622 = vmul.f32 %v615, 1.442695
    %v623 = vpow.pop %v622
    %v624 = vmul.f32 %v616, 1.442695
    %v625 = vpow.pop %v624
    %v626 = vsel %vm621, 1, 0
    %vm627 = vcmp.eq.s32.totalorder %v626, 1
    %v628 = vsel %vm627, %v623, %v615
    %v629 = vsel %vm627, %v625, %v616
    %v630 = vpack.c.bf16 %v629, %v628
    %v632 = vunpack.c.l.b16 %v630
    %v633 = vunpack.c.h.b16 %v630
    %v634 = vpack.c.b16 %v632, %v632
    %v635 = vpack.c.b16 %v633, %v633
    %638 = vst [vmem:[%s8] sm:$0xf] %v634
    %639 = vst [vmem:[%s8 + $0x4] sm:$0xf] %v635
    // Predicated region
    $region46: #{actor_critic_forward.1} parent=1 // pred_check
      _
    $region47: #{actor_critic_forward.1} parent=1 // pred_check_branch
      %641 = sbr.rel (0) target = $region49
    $region48: #{actor_critic_forward.1} parent=1 // pred_region
      _
    $region49: #{actor_critic_forward.1} parent=1 // pred_fallthru
      _
    // Predicated region
    $region50: #{actor_critic_forward.1} parent=1 // pred_check
      _
    $region51: #{actor_critic_forward.1} parent=1 // pred_check_branch
      %643 = sbr.rel (0) target = $region53
    $region52: #{actor_critic_forward.1} parent=1 // pred_region
      _
    $region53: #{actor_critic_forward.1} parent=1 // pred_fallthru
      _
    %644 = vsyncpa [#allocation3], 1
    %645 = vsyncpa [#allocation5], 1

</llo_original>
